<compile_context>
chip_gen: v7x
topology: tpu7x:2x2x1
jax: 0.10.0
libtpu: 0.0.40
codegen_flags: <defaults>
</compile_context>

<pallas_src>
import jax
import jax.numpy as jnp
from jax.experimental import pallas as pl
from jax.experimental.pallas import tpu as pltpu  # noqa: F401 (kept for TPU-specific tuning hooks)


def _sep_mlp_kernel(x_ref, w1_ref, b1_ref, w2_ref, b2_ref, o_ref):
    """All feature heads in one step: relu(x_f @ w1_f + b1_f) @ w2_f + b2_f."""
    n_feats = w1_ref.shape[0]
    # Static Python loop -> fully unrolled at trace time; every head is an
    # ordinary 2-D MXU matmul with f32 accumulation.
    for f in range(n_feats):
        x = x_ref[:, f, :]                                        # (B, dim)
        h = jnp.dot(x, w1_ref[f],
                    preferred_element_type=jnp.float32)           # (B, hidden)
        h = jnp.maximum(h + b1_ref[f], 0.0)                       # bias + ReLU
        o = jnp.dot(h, w2_ref[f],
                    preferred_element_type=jnp.float32)           # (B, cat_pad)
        o = o + b2_ref[f]
        o_ref[f] = o.astype(o_ref.dtype)


def sep_mlp_forward(x, params, categories):
    """x: (batch, len_feats, dim) -> list of (batch, categories[i]) arrays."""
    w1, b1, w2, b2 = params                     # stacked along feature axis
    B, F, dim = x.shape
    hidden = w1.shape[-1]
    cat_pad = w2.shape[-1]

    itemsize = jnp.dtype(x.dtype).itemsize
    flops = 2 * F * B * (dim * hidden + hidden * cat_pad)
    bytes_accessed = itemsize * (x.size + w1.size + b1.size + w2.size
                                 + b2.size + F * B * cat_pad)

    # No grid: every operand is a full VMEM-resident block; one kernel step.
    out = pl.pallas_call(
        _sep_mlp_kernel,
        out_shape=jax.ShapeDtypeStruct((F, B, cat_pad), x.dtype),
        cost_estimate=pl.CostEstimate(flops=flops, transcendentals=0,
                                      bytes_accessed=bytes_accessed),
    )(x, w1, b1, w2, b2)

    # Module semantics: a Python list of per-head (B, categories[i]) arrays.
    return [out[i, :, :categories[i]] for i in range(F)]


def init_sep_mlp_params(key, dim, len_feats, categories, dtype=jnp.float32):
    """Stacked params matching sep_MLP.__init__ shapes:
    per feature i: Linear(dim, 5*dim), Linear(5*dim, categories[i]).
    Second-layer weights/biases are zero-padded on the output axis to a
    128-lane multiple for lane-dense stores."""
    hidden = 5 * dim
    cat_pad = max(128, ((max(categories) + 127) // 128) * 128)
    bound1 = dim ** -0.5
    bound2 = hidden ** -0.5
    w1s, b1s, w2s, b2s = [], [], [], []
    for i in range(len_feats):
        k1, k2, k3, k4, key = jax.random.split(key, 5)
        w1 = jax.random.uniform(k1, (dim, hidden), dtype, -bound1, bound1)
        b1 = jax.random.uniform(k2, (1, hidden), dtype, -bound1, bound1)
        w2 = jax.random.uniform(k3, (hidden, categories[i]), dtype,
                                -bound2, bound2)
        b2 = jax.random.uniform(k4, (1, categories[i]), dtype,
                                -bound2, bound2)
        # Zero-pad the category axis to cat_pad (valid outputs unchanged).
        w2p = jnp.zeros((hidden, cat_pad), dtype).at[:, :categories[i]].set(w2)
        b2p = jnp.zeros((1, cat_pad), dtype).at[:, :categories[i]].set(b2)
        w1s.append(w1); b1s.append(b1); w2s.append(w2p); b2s.append(b2p)
    return (jnp.stack(w1s),   # (F, dim, hidden)
            jnp.stack(b1s),   # (F, 1, hidden)
            jnp.stack(w2s),   # (F, hidden, cat_pad)
            jnp.stack(b2s))   # (F, 1, cat_pad)


def sep_mlp_reference(x, params, categories):
    """Pure-JAX reference (matches the PyTorch module semantics)."""
    w1, b1, w2, b2 = params
    outs = []
    for i, cat in enumerate(categories):
        h = jnp.maximum(x[:, i, :] @ w1[i] + b1[i], 0.0)
        outs.append((h @ w2[i] + b2[i])[:, :cat])
    return outs


# TODO(synk): relprop (layer-wise relevance propagation) is a custom backward
# pass, not part of the forward semantics; it is not implemented here.


if __name__ == "__main__":
    batch = 8
    dim = 32
    len_feats = 3
    categories = [4, 7, 10]

    key = jax.random.PRNGKey(0)
    kx, kp = jax.random.split(key)
    x = jax.random.normal(kx, (batch, len_feats, dim), jnp.float32)
    params = init_sep_mlp_params(kp, dim, len_feats, categories)

    y_pred = sep_mlp_forward(x, params, categories)
    y_pred = [jax.block_until_ready(y) for y in y_pred]

    y_ref = sep_mlp_reference(x, params, categories)
    for yo, yr, cat in zip(y_pred, y_ref, categories):
        assert yo.shape == (batch, cat), yo.shape
        assert jnp.allclose(yo, yr, atol=1e-5, rtol=1e-5)

    print("KERNEL_OK")
</pallas_src>

<mosaic_0001>
module attributes {stable_mosaic.version = 11 : i64} {
  func.func @_sep_mlp_kernel(%arg0: memref<8x3x32xf32, #tpu.memory_space<vmem>>, %arg1: memref<3x32x160xf32, #tpu.memory_space<vmem>>, %arg2: memref<3x1x160xf32, #tpu.memory_space<vmem>>, %arg3: memref<3x160x128xf32, #tpu.memory_space<vmem>>, %arg4: memref<3x1x128xf32, #tpu.memory_space<vmem>>, %arg5: memref<3x8x128xf32, #tpu.memory_space<vmem>>) attributes {dimension_semantics = [], scalar_prefetch = 0 : i64, scratch_operands = 0 : i64, tpu.core_type = #tpu.core_type<tc>} {
    %c0 = arith.constant 0 : index
    %c0_0 = arith.constant 0 : index
    %c0_1 = arith.constant 0 : index
    %0 = vector.load %arg0[%c0, %c0_0, %c0_1] : memref<8x3x32xf32, #tpu.memory_space<vmem>>, vector<8x1x32xf32>
    %1 = vector.shape_cast %0 : vector<8x1x32xf32> to vector<8x32xf32>
    %c0_2 = arith.constant 0 : index
    %c0_3 = arith.constant 0 : index
    %c0_4 = arith.constant 0 : index
    %2 = vector.load %arg1[%c0_2, %c0_3, %c0_4] : memref<3x32x160xf32, #tpu.memory_space<vmem>>, vector<1x32x160xf32>
    %3 = vector.shape_cast %2 : vector<1x32x160xf32> to vector<32x160xf32>
    %cst = arith.constant dense<0.000000e+00> : vector<8x160xf32>
    %4 = tpu.matmul %1, %3, %cst {dimension_numbers = #tpu.dot_dimension_numbers<[1], [0], [0], [1], [0, 0, 1, 1], [], []>} : vector<8x32xf32>, vector<32x160xf32>, vector<8x160xf32> -> vector<8x160xf32>
    %c0_5 = arith.constant 0 : index
    %c0_6 = arith.constant 0 : index
    %c0_7 = arith.constant 0 : index
    %5 = vector.load %arg2[%c0_5, %c0_6, %c0_7] : memref<3x1x160xf32, #tpu.memory_space<vmem>>, vector<1x1x160xf32>
    %6 = vector.shape_cast %5 : vector<1x1x160xf32> to vector<1x160xf32>
    %7 = vector.broadcast %6 : vector<1x160xf32> to vector<8x160xf32>
    %8 = arith.addf %4, %7 : vector<8x160xf32>
    %cst_8 = arith.constant 0.000000e+00 : f32
    %9 = vector.broadcast %cst_8 : f32 to vector<8x160xf32>
    %10 = arith.maximumf %8, %9 : vector<8x160xf32>
    %c0_9 = arith.constant 0 : index
    %c0_10 = arith.constant 0 : index
    %c0_11 = arith.constant 0 : index
    %11 = vector.load %arg3[%c0_9, %c0_10, %c0_11] : memref<3x160x128xf32, #tpu.memory_space<vmem>>, vector<1x160x128xf32>
    %12 = vector.shape_cast %11 : vector<1x160x128xf32> to vector<160x128xf32>
    %cst_12 = arith.constant dense<0.000000e+00> : vector<8x128xf32>
    %13 = tpu.matmul %10, %12, %cst_12 {dimension_numbers = #tpu.dot_dimension_numbers<[1], [0], [0], [1], [0, 0, 1, 1], [], []>} : vector<8x160xf32>, vector<160x128xf32>, vector<8x128xf32> -> vector<8x128xf32>
    %c0_13 = arith.constant 0 : index
    %c0_14 = arith.constant 0 : index
    %c0_15 = arith.constant 0 : index
    %14 = vector.load %arg4[%c0_13, %c0_14, %c0_15] : memref<3x1x128xf32, #tpu.memory_space<vmem>>, vector<1x1x128xf32>
    %15 = vector.shape_cast %14 : vector<1x1x128xf32> to vector<1x128xf32>
    %16 = vector.broadcast %15 : vector<1x128xf32> to vector<8x128xf32>
    %17 = arith.addf %13, %16 : vector<8x128xf32>
    %c0_16 = arith.constant 0 : index
    %c0_17 = arith.constant 0 : index
    %c0_18 = arith.constant 0 : index
    %18 = vector.load %arg5[%c0_16, %c0_17, %c0_18] : memref<3x8x128xf32, #tpu.memory_space<vmem>>, vector<1x8x128xf32>
    %19 = vector.shape_cast %18 : vector<1x8x128xf32> to vector<8x128xf32>
    %20 = vector.shape_cast %17 : vector<8x128xf32> to vector<1x8x128xf32>
    tpu.vector_store %arg5[%c0_16, %c0_17, %c0_18], %20 {strides = array<i32>} : memref<3x8x128xf32, #tpu.memory_space<vmem>>, vector<1x8x128xf32>,
    %c0_19 = arith.constant 0 : index
    %c1 = arith.constant 1 : index
    %c0_20 = arith.constant 0 : index
    %21 = vector.load %arg0[%c0_19, %c1, %c0_20] : memref<8x3x32xf32, #tpu.memory_space<vmem>>, vector<8x1x32xf32>
    %22 = vector.shape_cast %21 : vector<8x1x32xf32> to vector<8x32xf32>
    %c1_21 = arith.constant 1 : index
    %c0_22 = arith.constant 0 : index
    %c0_23 = arith.constant 0 : index
    %23 = vector.load %arg1[%c1_21, %c0_22, %c0_23] : memref<3x32x160xf32, #tpu.memory_space<vmem>>, vector<1x32x160xf32>
    %24 = vector.shape_cast %23 : vector<1x32x160xf32> to vector<32x160xf32>
    %cst_24 = arith.constant dense<0.000000e+00> : vector<8x160xf32>
    %25 = tpu.matmul %22, %24, %cst_24 {dimension_numbers = #tpu.dot_dimension_numbers<[1], [0], [0], [1], [0, 0, 1, 1], [], []>} : vector<8x32xf32>, vector<32x160xf32>, vector<8x160xf32> -> vector<8x160xf32>
    %c1_25 = arith.constant 1 : index
    %c0_26 = arith.constant 0 : index
    %c0_27 = arith.constant 0 : index
    %26 = vector.load %arg2[%c1_25, %c0_26, %c0_27] : memref<3x1x160xf32, #tpu.memory_space<vmem>>, vector<1x1x160xf32>
    %27 = vector.shape_cast %26 : vector<1x1x160xf32> to vector<1x160xf32>
    %28 = vector.broadcast %27 : vector<1x160xf32> to vector<8x160xf32>
    %29 = arith.addf %25, %28 : vector<8x160xf32>
    %cst_28 = arith.constant 0.000000e+00 : f32
    %30 = vector.broadcast %cst_28 : f32 to vector<8x160xf32>
    %31 = arith.maximumf %29, %30 : vector<8x160xf32>
    %c1_29 = arith.constant 1 : index
    %c0_30 = arith.constant 0 : index
    %c0_31 = arith.constant 0 : index
    %32 = vector.load %arg3[%c1_29, %c0_30, %c0_31] : memref<3x160x128xf32, #tpu.memory_space<vmem>>, vector<1x160x128xf32>
    %33 = vector.shape_cast %32 : vector<1x160x128xf32> to vector<160x128xf32>
    %cst_32 = arith.constant dense<0.000000e+00> : vector<8x128xf32>
    %34 = tpu.matmul %31, %33, %cst_32 {dimension_numbers = #tpu.dot_dimension_numbers<[1], [0], [0], [1], [0, 0, 1, 1], [], []>} : vector<8x160xf32>, vector<160x128xf32>, vector<8x128xf32> -> vector<8x128xf32>
    %c1_33 = arith.constant 1 : index
    %c0_34 = arith.constant 0 : index
    %c0_35 = arith.constant 0 : index
    %35 = vector.load %arg4[%c1_33, %c0_34, %c0_35] : memref<3x1x128xf32, #tpu.memory_space<vmem>>, vector<1x1x128xf32>
    %36 = vector.shape_cast %35 : vector<1x1x128xf32> to vector<1x128xf32>
    %37 = vector.broadcast %36 : vector<1x128xf32> to vector<8x128xf32>
    %38 = arith.addf %34, %37 : vector<8x128xf32>
    %c1_36 = arith.constant 1 : index
    %c0_37 = arith.constant 0 : index
    %c0_38 = arith.constant 0 : index
    %39 = vector.load %arg5[%c1_36, %c0_37, %c0_38] : memref<3x8x128xf32, #tpu.memory_space<vmem>>, vector<1x8x128xf32>
    %40 = vector.shape_cast %39 : vector<1x8x128xf32> to vector<8x128xf32>
    %41 = vector.shape_cast %38 : vector<8x128xf32> to vector<1x8x128xf32>
    tpu.vector_store %arg5[%c1_36, %c0_37, %c0_38], %41 {strides = array<i32>} : memref<3x8x128xf32, #tpu.memory_space<vmem>>, vector<1x8x128xf32>,
    %c0_39 = arith.constant 0 : index
    %c2 = arith.constant 2 : index
    %c0_40 = arith.constant 0 : index
    %42 = vector.load %arg0[%c0_39, %c2, %c0_40] : memref<8x3x32xf32, #tpu.memory_space<vmem>>, vector<8x1x32xf32>
    %43 = vector.shape_cast %42 : vector<8x1x32xf32> to vector<8x32xf32>
    %c2_41 = arith.constant 2 : index
    %c0_42 = arith.constant 0 : index
    %c0_43 = arith.constant 0 : index
    %44 = vector.load %arg1[%c2_41, %c0_42, %c0_43] : memref<3x32x160xf32, #tpu.memory_space<vmem>>, vector<1x32x160xf32>
    %45 = vector.shape_cast %44 : vector<1x32x160xf32> to vector<32x160xf32>
    %cst_44 = arith.constant dense<0.000000e+00> : vector<8x160xf32>
    %46 = tpu.matmul %43, %45, %cst_44 {dimension_numbers = #tpu.dot_dimension_numbers<[1], [0], [0], [1], [0, 0, 1, 1], [], []>} : vector<8x32xf32>, vector<32x160xf32>, vector<8x160xf32> -> vector<8x160xf32>
    %c2_45 = arith.constant 2 : index
    %c0_46 = arith.constant 0 : index
    %c0_47 = arith.constant 0 : index
    %47 = vector.load %arg2[%c2_45, %c0_46, %c0_47] : memref<3x1x160xf32, #tpu.memory_space<vmem>>, vector<1x1x160xf32>
    %48 = vector.shape_cast %47 : vector<1x1x160xf32> to vector<1x160xf32>
    %49 = vector.broadcast %48 : vector<1x160xf32> to vector<8x160xf32>
    %50 = arith.addf %46, %49 : vector<8x160xf32>
    %cst_48 = arith.constant 0.000000e+00 : f32
    %51 = vector.broadcast %cst_48 : f32 to vector<8x160xf32>
    %52 = arith.maximumf %50, %51 : vector<8x160xf32>
    %c2_49 = arith.constant 2 : index
    %c0_50 = arith.constant 0 : index
    %c0_51 = arith.constant 0 : index
    %53 = vector.load %arg3[%c2_49, %c0_50, %c0_51] : memref<3x160x128xf32, #tpu.memory_space<vmem>>, vector<1x160x128xf32>
    %54 = vector.shape_cast %53 : vector<1x160x128xf32> to vector<160x128xf32>
    %cst_52 = arith.constant dense<0.000000e+00> : vector<8x128xf32>
    %55 = tpu.matmul %52, %54, %cst_52 {dimension_numbers = #tpu.dot_dimension_numbers<[1], [0], [0], [1], [0, 0, 1, 1], [], []>} : vector<8x160xf32>, vector<160x128xf32>, vector<8x128xf32> -> vector<8x128xf32>
    %c2_53 = arith.constant 2 : index
    %c0_54 = arith.constant 0 : index
    %c0_55 = arith.constant 0 : index
    %56 = vector.load %arg4[%c2_53, %c0_54, %c0_55] : memref<3x1x128xf32, #tpu.memory_space<vmem>>, vector<1x1x128xf32>
    %57 = vector.shape_cast %56 : vector<1x1x128xf32> to vector<1x128xf32>
    %58 = vector.broadcast %57 : vector<1x128xf32> to vector<8x128xf32>
    %59 = arith.addf %55, %58 : vector<8x128xf32>
    %c2_56 = arith.constant 2 : index
    %c0_57 = arith.constant 0 : index
    %c0_58 = arith.constant 0 : index
    %60 = vector.load %arg5[%c2_56, %c0_57, %c0_58] : memref<3x8x128xf32, #tpu.memory_space<vmem>>, vector<1x8x128xf32>
    %61 = vector.shape_cast %60 : vector<1x8x128xf32> to vector<8x128xf32>
    %62 = vector.shape_cast %59 : vector<8x128xf32> to vector<1x8x128xf32>
    tpu.vector_store %arg5[%c2_56, %c0_57, %c0_58], %62 {strides = array<i32>} : memref<3x8x128xf32, #tpu.memory_space<vmem>>, vector<1x8x128xf32>,
    return
  }
}

</mosaic_0001>

<llo_original>
// kernel: tpu_custom_call.1
$region0: #{tpu_custom_call.1}
  #allocation0 [shape = 'u32[]', space=smem, size = 0x4, offset = 0x4, fixed_abs, tag = 'smem constant byte address 0x4 - core index']
  #allocation1 [shape = 'u32[144,128]{1,0:T(1,128)}', space=vmem, size = 0x12000, scoped, tag = 'internal scratch']
  %s0 = inlined_call_operand.vmem [shape: f32[8,3,32], index: 0, kind: input, shape index: {}]
  %s1 = inlined_call_operand.hbm [shape: f32[3,32,160], index: 1, kind: input, shape index: {}]
  %s2 = inlined_call_operand.vmem [shape: f32[3,1,160], index: 2, kind: input, shape index: {}]
  %s3 = inlined_call_operand.hbm [shape: f32[3,160,128], index: 3, kind: input, shape index: {}]
  %s4 = inlined_call_operand.vmem [shape: f32[3,1,128], index: 4, kind: input, shape index: {}]
  %s5 = inlined_call_operand.hbm [shape: f32[3,8,128], index: 5, kind: output, shape index: {}]
  %s6 = sld [smem:[#allocation0]]
  $region38: #{tpu_custom_call.1} parent=0
    _
  %s8 = ssub.s32 1, %s6
  %s9 = scalar_select 0, %s8, %s6
  $region1: #{tpu_custom_call.1} parent=0
    #allocation2 [shape = 'u8[98304]{0}', space=vmem, size = 0x18000, scoped, tag = 'input window, operand 1, single buffered']
    #allocation3 [shape = 's32[1]{0}', space=sflag, size = 0x4, scoped, tag = 'scoped memory for tpu_custom_call.1']
    #allocation4 [shape = 's32[1]{0}', space=sflag, size = 0x4, scoped, tag = 'scoped memory for tpu_custom_call.1']
    #allocation5 [shape = 'u8[245760]{0}', space=vmem, size = 0x3c000, scoped, tag = 'input window, operand 3, single buffered']
    #allocation6 [shape = 's32[1]{0}', space=sflag, size = 0x4, scoped, tag = 'scoped memory for tpu_custom_call.1']
    #allocation7 [shape = 'u8[12288]{0}', space=vmem, size = 0x3000, scoped, tag = 'output window, operand 0, single buffered']
    %10 = vsyncpa [#allocation3], 0
    %11 = vsyncpa [#allocation6], 0
    %12 = vsyncpa [#allocation4], 0
    // Predicated region
    $region2: #{tpu_custom_call.1} parent=1 // pred_check
      _
    $region3: #{tpu_custom_call.1} parent=1 // pred_check_branch
      %14 = sbr.rel (0) target = $region5
    $region4: #{tpu_custom_call.1} parent=1 // pred_region
      _
    $region5: #{tpu_custom_call.1} parent=1 // pred_fallthru
      _
    // Predicated region
    $region6: #{tpu_custom_call.1} parent=1 // pred_check
      _
    $region7: #{tpu_custom_call.1} parent=1 // pred_check_branch
      %16 = sbr.rel (0) target = $region9
    $region8: #{tpu_custom_call.1} parent=1 // pred_region
      %s18 = ssub.s32 3072, 3072
      %19 = vsyncadd [#allocation3], %s18
      %s20 = sshll.u32 [#allocation2], 4
      %s21 = int_to_ptr.vmem [resolvable:$true] %s20
      %26 = dma.hbm_to_vmem [thread:$0]  %s1, 3072, %s21, [#allocation3], 256, 256, 16
    $region9: #{tpu_custom_call.1} parent=1 // pred_fallthru
      _
    // Predicated region
    $region10: #{tpu_custom_call.1} parent=1 // pred_check
      _
    $region11: #{tpu_custom_call.1} parent=1 // pred_check_branch
      %28 = sbr.rel (0) target = $region13
    $region12: #{tpu_custom_call.1} parent=1 // pred_region
      _
    $region13: #{tpu_custom_call.1} parent=1 // pred_fallthru
      _
    // Predicated region
    $region14: #{tpu_custom_call.1} parent=1 // pred_check
      _
    $region15: #{tpu_custom_call.1} parent=1 // pred_check_branch
      %30 = sbr.rel (0) target = $region17
    $region16: #{tpu_custom_call.1} parent=1 // pred_region
      %s32 = ssub.s32 7680, 7680
      %33 = vsyncadd [#allocation6], %s32
      %s34 = sshll.u32 [#allocation5], 4
      %s35 = int_to_ptr.vmem [resolvable:$true] %s34
      %40 = dma.hbm_to_vmem [thread:$0]  %s3, 7680, %s35, [#allocation6], 128, 128, 8
    $region17: #{tpu_custom_call.1} parent=1 // pred_fallthru
      _
    // Predicated region
    $region18: #{tpu_custom_call.1} parent=1 // pred_check
      _
    $region19: #{tpu_custom_call.1} parent=1 // pred_check_branch
      %42 = sbr.rel (0) target = $region21
    $region20: #{tpu_custom_call.1} parent=1 // pred_region
      _
    $region21: #{tpu_custom_call.1} parent=1 // pred_fallthru
      _
    // Predicated region
    $region22: #{tpu_custom_call.1} parent=1 // pred_check
      _
    $region23: #{tpu_custom_call.1} parent=1 // pred_check_branch
      %44 = sbr.rel (0) target = $region25
    $region24: #{tpu_custom_call.1} parent=1 // pred_region
      %45 = dma.done [#allocation3], 3072
    $region25: #{tpu_custom_call.1} parent=1 // pred_fallthru
      _
    // Predicated region
    $region26: #{tpu_custom_call.1} parent=1 // pred_check
      _
    $region27: #{tpu_custom_call.1} parent=1 // pred_check_branch
      %47 = sbr.rel (0) target = $region29
    $region28: #{tpu_custom_call.1} parent=1 // pred_region
      %48 = dma.done [#allocation6], 7680
    $region29: #{tpu_custom_call.1} parent=1 // pred_fallthru
      _
    %v49 = vld [vmem:[%s0] sm:$0x1]
    %v50 = vld [vmem:[%s0 + $0x4] sm:$0x1]
    %v51 = vld [vmem:[%s0 + $0x8] sm:$0x1]
    %v52 = vld [vmem:[%s0 + $0xc] sm:$0x1]
    %v53 = vld [vmem:[%s0 + $0x10] sm:$0x1]
    %v54 = vld [vmem:[%s0 + $0x14] sm:$0x1]
    %v55 = vld [vmem:[%s0 + $0x18] sm:$0x1]
    %v56 = vld [vmem:[%s0 + $0x1c] sm:$0x1]
    %v57 = vld [vmem:[#allocation2] sm:$0xff]
    %v58 = vld [vmem:[#allocation2 + $0x8] sm:$0xff]
    %v59 = vld [vmem:[#allocation2 + $0x10] sm:$0xff]
    %v60 = vld [vmem:[#allocation2 + $0x18] sm:$0xff]
    %v61 = vld [vmem:[#allocation2 + $0x20] sm:$0xff]
    %v62 = vld [vmem:[#allocation2 + $0x28] sm:$0xff]
    %v63 = vld [vmem:[#allocation2 + $0x30] sm:$0xff]
    %v64 = vld [vmem:[#allocation2 + $0x38] sm:$0xff]
    %v65 = vld [vmem:[%s2] sm:$0x3]
    %v67 = vlaneseq
    %v68 = vshrl.u32 %v67, 7
    %v69 = vsub.s32 0, %v68
    %v70 = vrot.slane %v65, %v69
    %v71 = vlaneseq
    %v72 = vshrl.u32 %v71, 7
    %v73 = vsub.s32 1, %v72
    %v74 = vrot.slane %v65, %v73
    %v85 = vrot.slane %v50, 7
    %vm86 = vcmask 1041409
    %v87 = vsel %vm86, %v85, %v49
    %v88 = vrot.slane %v51, 6
    %vm89 = vcmask 1042434
    %v90 = vsel %vm89, %v88, %v87
    %v91 = vrot.slane %v52, 5
    %vm92 = vcmask 1043459
    %v93 = vsel %vm92, %v91, %v90
    %v94 = vrot.slane %v53, 4
    %vm95 = vcmask 1044484
    %v96 = vsel %vm95, %v94, %v93
    %v97 = vrot.slane %v54, 3
    %vm98 = vcmask 1045509
    %v99 = vsel %vm98, %v97, %v96
    %v100 = vrot.slane %v55, 2
    %vm101 = vcmask 1046534
    %v102 = vsel %vm101, %v100, %v99
    %v103 = vrot.slane %v56, 1
    %vm104 = vcmask 1047559
    %v105 = vsel %vm104, %v103, %v102
    %vm106 = vcmask 261120
    %v107 = vsel %vm106, %v105, 0
    %109 = vmatprep.subr.mxu0 %v58
    %110 = vmatpush1.msra.mxu0 %v57
    %111 = vmatprep.subr.mxu0 %v60
    %112 = vmatpush1.msra.mxu0 %v59
    %113 = vmatprep.subr.mxu0 %v62
    %114 = vmatpush1.msra.mxu0 %v61
    %115 = vmatprep.subr.mxu0 %v64
    %116 = vmatpush1.msra.mxu0 %v63
    %117 = vmatprep.subr.mxu0 0.0
    %118 = vmatpush1.msra.mxu0 0.0
    %119 = vmatprep.subr.mxu0 0.0
    %120 = vmatpush1.msra.mxu0 0.0
    %121 = vmatprep.subr.mxu0 0.0
    %122 = vmatpush1.msra.mxu0 0.0
    %123 = vmatprep.subr.mxu0 0.0
    %124 = vmatpush1.msra.mxu0 0.0
    %125 = vmatprep.subr.mxu0 0.0
    %126 = vmatpush1.msra.mxu0 0.0
    %127 = vmatprep.subr.mxu0 0.0
    %128 = vmatpush1.msra.mxu0 0.0
    %129 = vmatprep.subr.mxu0 0.0
    %130 = vmatpush1.msra.mxu0 0.0
    %131 = vmatprep.subr.mxu0 0.0
    %132 = vmatpush1.msra.mxu0 0.0
    %133 = vmatprep.subr.mxu0 0.0
    %134 = vmatpush1.msra.mxu0 0.0
    %135 = vmatprep.subr.mxu0 0.0
    %136 = vmatpush1.msra.mxu0 0.0
    %137 = vmatprep.subr.mxu0 0.0
    %138 = vmatpush1.msra.mxu0 0.0
    %139 = vmatprep.subr.mxu0 0.0
    %140 = vmatpush1.msra.mxu0 0.0
    %141 = vmatprep.subr.mxu0 0.0
    %142 = vmatpush1.msra.mxu0 0.0
    %143 = vmatprep.subr.mxu0 0.0
    %144 = vmatpush1.msra.mxu0 0.0
    %145 = vmatprep.subr.mxu0 0.0
    %146 = vmatpush1.msra.mxu0 0.0
    %147 = vmatprep.subr.mxu0 0.0
    %148 = vmatpush1.msra.mxu0 0.0
    %149 = vmatprep.subr.mxu0 0.0
    %150 = vmatpush1.msra.mxu0 0.0
    %151 = vmatprep.subr.mxu0 0.0
    %152 = vmatpush1.msra.mxu0 0.0
    %153 = vmatprep.subr.mxu0 0.0
    %154 = vmatpush1.msra.mxu0 0.0
    %155 = vmatprep.subr.mxu0 0.0
    %156 = vmatpush1.msra.mxu0 0.0
    %157 = vmatprep.subr.mxu0 0.0
    %158 = vmatpush1.msra.mxu0 0.0
    %159 = vmatprep.subr.mxu0 0.0
    %160 = vmatpush1.msra.mxu0 0.0
    %161 = vmatprep.subr.mxu0 0.0
    %162 = vmatpush1.msra.mxu0 0.0
    %163 = vmatprep.subr.mxu0 0.0
    %164 = vmatpush1.msra.mxu0 0.0
    %165 = vmatprep.subr.mxu0 0.0
    %166 = vmatpush1.msra.mxu0 0.0
    %167 = vmatprep.subr.mxu0 0.0
    %168 = vmatpush1.msra.mxu0 0.0
    %169 = vmatprep.subr.mxu0 0.0
    %170 = vmatpush1.msra.mxu0 0.0
    %171 = vmatprep.subr.mxu0 0.0
    %172 = vmatpush1.msra.mxu0 0.0
    %173 = vmatprep.mubr.f32.mxu0 0.0
    %174 = vmatmul.mubr.f32.gmra.mrb[0].mxu0 %v107
    %v175 = vpop.f32.mrb[0].mxu0
    %v176 = vadd.f32 %v70, %v175
    %v177 = vpop.f32.mrb[0].mxu0
    %v178 = vadd.f32 %v74, %v177
    %179 = vdwg.mxu0
    %v180 = vmax.f32 %v176, 0.0
    %v181 = vmax.f32 %v178, 0.0
    %v182 = vld [vmem:[#allocation5] sm:$0xff]
    %v183 = vld [vmem:[#allocation5 + $0x8] sm:$0xff]
    %v184 = vld [vmem:[#allocation5 + $0x10] sm:$0xff]
    %v185 = vld [vmem:[#allocation5 + $0x18] sm:$0xff]
    %v186 = vld [vmem:[#allocation5 + $0x20] sm:$0xff]
    %v187 = vld [vmem:[#allocation5 + $0x28] sm:$0xff]
    %v188 = vld [vmem:[#allocation5 + $0x30] sm:$0xff]
    %v189 = vld [vmem:[#allocation5 + $0x38] sm:$0xff]
    %v190 = vld [vmem:[#allocation5 + $0x40] sm:$0xff]
    %v191 = vld [vmem:[#allocation5 + $0x48] sm:$0xff]
    %v192 = vld [vmem:[#allocation5 + $0x50] sm:$0xff]
    %v193 = vld [vmem:[#allocation5 + $0x58] sm:$0xff]
    %v194 = vld [vmem:[#allocation5 + $0x60] sm:$0xff]
    %v195 = vld [vmem:[#allocation5 + $0x68] sm:$0xff]
    %v196 = vld [vmem:[#allocation5 + $0x70] sm:$0xff]
    %v197 = vld [vmem:[#allocation5 + $0x78] sm:$0xff]
    %v198 = vld [vmem:[#allocation5 + $0x80] sm:$0xff]
    %v199 = vld [vmem:[#allocation5 + $0x88] sm:$0xff]
    %v200 = vld [vmem:[#allocation5 + $0x90] sm:$0xff]
    %v201 = vld [vmem:[#allocation5 + $0x98] sm:$0xff]
    %v202 = vld [vmem:[%s4] sm:$0x1]
    %v204 = vlaneseq
    %v205 = vshrl.u32 %v204, 7
    %v206 = vsub.s32 0, %v205
    %v207 = vrot.slane %v202, %v206
    %v210 = vsel %vm106, %v181, 0
    %212 = vmatprep.subr.mxu0 0.0
    %213 = vmatpush1.msra.mxu0 %v182
    %214 = vmatprep.subr.mxu0 0.0
    %215 = vmatpush1.msra.mxu0 %v183
    %216 = vmatprep.subr.mxu0 0.0
    %217 = vmatpush1.msra.mxu0 %v184
    %218 = vmatprep.subr.mxu0 0.0
    %219 = vmatpush1.msra.mxu0 %v185
    %220 = vmatprep.subr.mxu0 0.0
    %221 = vmatpush1.msra.mxu0 %v186
    %222 = vmatprep.subr.mxu0 0.0
    %223 = vmatpush1.msra.mxu0 %v187
    %224 = vmatprep.subr.mxu0 0.0
    %225 = vmatpush1.msra.mxu0 %v188
    %226 = vmatprep.subr.mxu0 0.0
    %227 = vmatpush1.msra.mxu0 %v189
    %228 = vmatprep.subr.mxu0 0.0
    %229 = vmatpush1.msra.mxu0 %v190
    %230 = vmatprep.subr.mxu0 0.0
    %231 = vmatpush1.msra.mxu0 %v191
    %232 = vmatprep.subr.mxu0 0.0
    %233 = vmatpush1.msra.mxu0 %v192
    %234 = vmatprep.subr.mxu0 0.0
    %235 = vmatpush1.msra.mxu0 %v193
    %236 = vmatprep.subr.mxu0 0.0
    %237 = vmatpush1.msra.mxu0 %v194
    %238 = vmatprep.subr.mxu0 0.0
    %239 = vmatpush1.msra.mxu0 %v195
    %240 = vmatprep.subr.mxu0 0.0
    %241 = vmatpush1.msra.mxu0 %v196
    %242 = vmatprep.subr.mxu0 0.0
    %243 = vmatpush1.msra.mxu0 %v197
    %244 = vmatprep.subr.mxu0 0.0
    %245 = vmatpush1.msra.mxu0 %v198
    %246 = vmatprep.subr.mxu0 0.0
    %247 = vmatpush1.msra.mxu0 %v199
    %248 = vmatprep.subr.mxu0 0.0
    %249 = vmatpush1.msra.mxu0 %v200
    %250 = vmatprep.subr.mxu0 0.0
    %251 = vmatpush1.msra.mxu0 %v201
    %252 = vmatprep.subr.mxu0 0.0
    %253 = vmatpush1.msra.mxu0 0.0
    %254 = vmatprep.subr.mxu0 0.0
    %255 = vmatpush1.msra.mxu0 0.0
    %256 = vmatprep.subr.mxu0 0.0
    %257 = vmatpush1.msra.mxu0 0.0
    %258 = vmatprep.subr.mxu0 0.0
    %259 = vmatpush1.msra.mxu0 0.0
    %260 = vmatprep.subr.mxu0 0.0
    %261 = vmatpush1.msra.mxu0 0.0
    %262 = vmatprep.subr.mxu0 0.0
    %263 = vmatpush1.msra.mxu0 0.0
    %264 = vmatprep.subr.mxu0 0.0
    %265 = vmatpush1.msra.mxu0 0.0
    %266 = vmatprep.subr.mxu0 0.0
    %267 = vmatpush1.msra.mxu0 0.0
    %268 = vmatprep.subr.mxu0 0.0
    %269 = vmatpush1.msra.mxu0 0.0
    %270 = vmatprep.subr.mxu0 0.0
    %271 = vmatpush1.msra.mxu0 0.0
    %272 = vmatprep.subr.mxu0 0.0
    %273 = vmatpush1.msra.mxu0 0.0
    %274 = vmatprep.subr.mxu0 0.0
    %275 = vmatpush1.msra.mxu0 0.0
    %276 = vmatprep.mubr.f32.mxu0 %v210
    %277 = vmatmul.mubr.f32.gmra.mrb[0].mxu0 %v180
    %v278 = vpop.f32.mrb[0].mxu0
    %v279 = vadd.f32 %v207, %v278
    %v280 = vpop.f32.mrb[0].mxu0
    %281 = vdwg.mxu0
    %282 = vst [vmem:[#allocation7] sm:$0xff] %v279
    %v283 = vld [vmem:[%s0 + $0x1] sm:$0x1]
    %v284 = vld [vmem:[%s0 + $0x5] sm:$0x1]
    %v285 = vld [vmem:[%s0 + $0x9] sm:$0x1]
    %v286 = vld [vmem:[%s0 + $0xd] sm:$0x1]
    %v287 = vld [vmem:[%s0 + $0x11] sm:$0x1]
    %v288 = vld [vmem:[%s0 + $0x15] sm:$0x1]
    %v289 = vld [vmem:[%s0 + $0x19] sm:$0x1]
    %v290 = vld [vmem:[%s0 + $0x1d] sm:$0x1]
    %s291 = scalar_lea.vmem [#allocation2], 64
    %v292 = vld [vmem:[%s291] sm:$0xff]
    %v293 = vld [vmem:[%s291 + $0x8] sm:$0xff]
    %v294 = vld [vmem:[%s291 + $0x10] sm:$0xff]
    %v295 = vld [vmem:[%s291 + $0x18] sm:$0xff]
    %v296 = vld [vmem:[%s291 + $0x20] sm:$0xff]
    %v297 = vld [vmem:[%s291 + $0x28] sm:$0xff]
    %v298 = vld [vmem:[%s291 + $0x30] sm:$0xff]
    %v299 = vld [vmem:[%s291 + $0x38] sm:$0xff]
    %s300 = scalar_lea.vmem %s2, 2
    %v301 = vld [vmem:[%s300] sm:$0x3]
    %v303 = vlaneseq
    %v304 = vshrl.u32 %v303, 7
    %v305 = vsub.s32 0, %v304
    %v306 = vrot.slane %v301, %v305
    %v307 = vlaneseq
    %v308 = vshrl.u32 %v307, 7
    %v309 = vsub.s32 1, %v308
    %v310 = vrot.slane %v301, %v309
    %v321 = vrot.slane %v284, 7
    %v322 = vsel %vm86, %v321, %v283
    %v323 = vrot.slane %v285, 6
    %v324 = vsel %vm89, %v323, %v322
    %v325 = vrot.slane %v286, 5
    %v326 = vsel %vm92, %v325, %v324
    %v327 = vrot.slane %v287, 4
    %v328 = vsel %vm95, %v327, %v326
    %v329 = vrot.slane %v288, 3
    %v330 = vsel %vm98, %v329, %v328
    %v331 = vrot.slane %v289, 2
    %v332 = vsel %vm101, %v331, %v330
    %v333 = vrot.slane %v290, 1
    %v334 = vsel %vm104, %v333, %v332
    %v335 = vsel %vm106, %v334, 0
    %337 = vmatprep.subr.mxu0 %v293
    %338 = vmatpush1.msra.mxu0 %v292
    %339 = vmatprep.subr.mxu0 %v295
    %340 = vmatpush1.msra.mxu0 %v294
    %341 = vmatprep.subr.mxu0 %v297
    %342 = vmatpush1.msra.mxu0 %v296
    %343 = vmatprep.subr.mxu0 %v299
    %344 = vmatpush1.msra.mxu0 %v298
    %345 = vmatprep.subr.mxu0 0.0
    %346 = vmatpush1.msra.mxu0 0.0
    %347 = vmatprep.subr.mxu0 0.0
    %348 = vmatpush1.msra.mxu0 0.0
    %349 = vmatprep.subr.mxu0 0.0
    %350 = vmatpush1.msra.mxu0 0.0
    %351 = vmatprep.subr.mxu0 0.0
    %352 = vmatpush1.msra.mxu0 0.0
    %353 = vmatprep.subr.mxu0 0.0
    %354 = vmatpush1.msra.mxu0 0.0
    %355 = vmatprep.subr.mxu0 0.0
    %356 = vmatpush1.msra.mxu0 0.0
    %357 = vmatprep.subr.mxu0 0.0
    %358 = vmatpush1.msra.mxu0 0.0
    %359 = vmatprep.subr.mxu0 0.0
    %360 = vmatpush1.msra.mxu0 0.0
    %361 = vmatprep.subr.mxu0 0.0
    %362 = vmatpush1.msra.mxu0 0.0
    %363 = vmatprep.subr.mxu0 0.0
    %364 = vmatpush1.msra.mxu0 0.0
    %365 = vmatprep.subr.mxu0 0.0
    %366 = vmatpush1.msra.mxu0 0.0
    %367 = vmatprep.subr.mxu0 0.0
    %368 = vmatpush1.msra.mxu0 0.0
    %369 = vmatprep.subr.mxu0 0.0
    %370 = vmatpush1.msra.mxu0 0.0
    %371 = vmatprep.subr.mxu0 0.0
    %372 = vmatpush1.msra.mxu0 0.0
    %373 = vmatprep.subr.mxu0 0.0
    %374 = vmatpush1.msra.mxu0 0.0
    %375 = vmatprep.subr.mxu0 0.0
    %376 = vmatpush1.msra.mxu0 0.0
    %377 = vmatprep.subr.mxu0 0.0
    %378 = vmatpush1.msra.mxu0 0.0
    %379 = vmatprep.subr.mxu0 0.0
    %380 = vmatpush1.msra.mxu0 0.0
    %381 = vmatprep.subr.mxu0 0.0
    %382 = vmatpush1.msra.mxu0 0.0
    %383 = vmatprep.subr.mxu0 0.0
    %384 = vmatpush1.msra.mxu0 0.0
    %385 = vmatprep.subr.mxu0 0.0
    %386 = vmatpush1.msra.mxu0 0.0
    %387 = vmatprep.subr.mxu0 0.0
    %388 = vmatpush1.msra.mxu0 0.0
    %389 = vmatprep.subr.mxu0 0.0
    %390 = vmatpush1.msra.mxu0 0.0
    %391 = vmatprep.subr.mxu0 0.0
    %392 = vmatpush1.msra.mxu0 0.0
    %393 = vmatprep.subr.mxu0 0.0
    %394 = vmatpush1.msra.mxu0 0.0
    %395 = vmatprep.subr.mxu0 0.0
    %396 = vmatpush1.msra.mxu0 0.0
    %397 = vmatprep.subr.mxu0 0.0
    %398 = vmatpush1.msra.mxu0 0.0
    %399 = vmatprep.subr.mxu0 0.0
    %400 = vmatpush1.msra.mxu0 0.0
    %401 = vmatprep.mubr.f32.mxu0 0.0
    %402 = vmatmul.mubr.f32.gmra.mrb[0].mxu0 %v335
    %v403 = vpop.f32.mrb[0].mxu0
    %v404 = vadd.f32 %v306, %v403
    %v405 = vpop.f32.mrb[0].mxu0
    %v406 = vadd.f32 %v310, %v405
    %407 = vdwg.mxu0
    %v408 = vmax.f32 %v404, 0.0
    %v409 = vmax.f32 %v406, 0.0
    %s410 = scalar_lea.vmem [#allocation5], 160
    %v411 = vld [vmem:[%s410] sm:$0xff]
    %v412 = vld [vmem:[%s410 + $0x8] sm:$0xff]
    %v413 = vld [vmem:[%s410 + $0x10] sm:$0xff]
    %v414 = vld [vmem:[%s410 + $0x18] sm:$0xff]
    %v415 = vld [vmem:[%s410 + $0x20] sm:$0xff]
    %v416 = vld [vmem:[%s410 + $0x28] sm:$0xff]
    %v417 = vld [vmem:[%s410 + $0x30] sm:$0xff]
    %v418 = vld [vmem:[%s410 + $0x38] sm:$0xff]
    %v419 = vld [vmem:[%s410 + $0x40] sm:$0xff]
    %v420 = vld [vmem:[%s410 + $0x48] sm:$0xff]
    %v421 = vld [vmem:[%s410 + $0x50] sm:$0xff]
    %v422 = vld [vmem:[%s410 + $0x58] sm:$0xff]
    %v423 = vld [vmem:[%s410 + $0x60] sm:$0xff]
    %v424 = vld [vmem:[%s410 + $0x68] sm:$0xff]
    %v425 = vld [vmem:[%s410 + $0x70] sm:$0xff]
    %v426 = vld [vmem:[%s410 + $0x78] sm:$0xff]
    %v427 = vld [vmem:[%s410 + $0x80] sm:$0xff]
    %v428 = vld [vmem:[%s410 + $0x88] sm:$0xff]
    %v429 = vld [vmem:[%s410 + $0x90] sm:$0xff]
    %v430 = vld [vmem:[%s410 + $0x98] sm:$0xff]
    %s431 = scalar_lea.vmem %s4, 1
    %v432 = vld [vmem:[%s431] sm:$0x1]
    %v434 = vlaneseq
    %v435 = vshrl.u32 %v434, 7
    %v436 = vsub.s32 0, %v435
    %v437 = vrot.slane %v432, %v436
    %v440 = vsel %vm106, %v409, 0
    %442 = vmatprep.subr.mxu0 0.0
    %443 = vmatpush1.msra.mxu0 %v411
    %444 = vmatprep.subr.mxu0 0.0
    %445 = vmatpush1.msra.mxu0 %v412
    %446 = vmatprep.subr.mxu0 0.0
    %447 = vmatpush1.msra.mxu0 %v413
    %448 = vmatprep.subr.mxu0 0.0
    %449 = vmatpush1.msra.mxu0 %v414
    %450 = vmatprep.subr.mxu0 0.0
    %451 = vmatpush1.msra.mxu0 %v415
    %452 = vmatprep.subr.mxu0 0.0
    %453 = vmatpush1.msra.mxu0 %v416
    %454 = vmatprep.subr.mxu0 0.0
    %455 = vmatpush1.msra.mxu0 %v417
    %456 = vmatprep.subr.mxu0 0.0
    %457 = vmatpush1.msra.mxu0 %v418
    %458 = vmatprep.subr.mxu0 0.0
    %459 = vmatpush1.msra.mxu0 %v419
    %460 = vmatprep.subr.mxu0 0.0
    %461 = vmatpush1.msra.mxu0 %v420
    %462 = vmatprep.subr.mxu0 0.0
    %463 = vmatpush1.msra.mxu0 %v421
    %464 = vmatprep.subr.mxu0 0.0
    %465 = vmatpush1.msra.mxu0 %v422
    %466 = vmatprep.subr.mxu0 0.0
    %467 = vmatpush1.msra.mxu0 %v423
    %468 = vmatprep.subr.mxu0 0.0
    %469 = vmatpush1.msra.mxu0 %v424
    %470 = vmatprep.subr.mxu0 0.0
    %471 = vmatpush1.msra.mxu0 %v425
    %472 = vmatprep.subr.mxu0 0.0
    %473 = vmatpush1.msra.mxu0 %v426
    %474 = vmatprep.subr.mxu0 0.0
    %475 = vmatpush1.msra.mxu0 %v427
    %476 = vmatprep.subr.mxu0 0.0
    %477 = vmatpush1.msra.mxu0 %v428
    %478 = vmatprep.subr.mxu0 0.0
    %479 = vmatpush1.msra.mxu0 %v429
    %480 = vmatprep.subr.mxu0 0.0
    %481 = vmatpush1.msra.mxu0 %v430
    %482 = vmatprep.subr.mxu0 0.0
    %483 = vmatpush1.msra.mxu0 0.0
    %484 = vmatprep.subr.mxu0 0.0
    %485 = vmatpush1.msra.mxu0 0.0
    %486 = vmatprep.subr.mxu0 0.0
    %487 = vmatpush1.msra.mxu0 0.0
    %488 = vmatprep.subr.mxu0 0.0
    %489 = vmatpush1.msra.mxu0 0.0
    %490 = vmatprep.subr.mxu0 0.0
    %491 = vmatpush1.msra.mxu0 0.0
    %492 = vmatprep.subr.mxu0 0.0
    %493 = vmatpush1.msra.mxu0 0.0
    %494 = vmatprep.subr.mxu0 0.0
    %495 = vmatpush1.msra.mxu0 0.0
    %496 = vmatprep.subr.mxu0 0.0
    %497 = vmatpush1.msra.mxu0 0.0
    %498 = vmatprep.subr.mxu0 0.0
    %499 = vmatpush1.msra.mxu0 0.0
    %500 = vmatprep.subr.mxu0 0.0
    %501 = vmatpush1.msra.mxu0 0.0
    %502 = vmatprep.subr.mxu0 0.0
    %503 = vmatpush1.msra.mxu0 0.0
    %504 = vmatprep.subr.mxu0 0.0
    %505 = vmatpush1.msra.mxu0 0.0
    %506 = vmatprep.mubr.f32.mxu0 %v440
    %507 = vmatmul.mubr.f32.gmra.mrb[0].mxu0 %v408
    %v508 = vpop.f32.mrb[0].mxu0
    %v509 = vadd.f32 %v437, %v508
    %v510 = vpop.f32.mrb[0].mxu0
    %511 = vdwg.mxu0
    %s512 = scalar_lea.vmem [#allocation7], 8
    %513 = vst [vmem:[%s512] sm:$0xff] %v509
    %v514 = vld [vmem:[%s0 + $0x2] sm:$0x1]
    %v515 = vld [vmem:[%s0 + $0x6] sm:$0x1]
    %v516 = vld [vmem:[%s0 + $0xa] sm:$0x1]
    %v517 = vld [vmem:[%s0 + $0xe] sm:$0x1]
    %v518 = vld [vmem:[%s0 + $0x12] sm:$0x1]
    %v519 = vld [vmem:[%s0 + $0x16] sm:$0x1]
    %v520 = vld [vmem:[%s0 + $0x1a] sm:$0x1]
    %v521 = vld [vmem:[%s0 + $0x1e] sm:$0x1]
    %s522 = scalar_lea.vmem [#allocation2], 128
    %v523 = vld [vmem:[%s522] sm:$0xff]
    %v524 = vld [vmem:[%s522 + $0x8] sm:$0xff]
    %v525 = vld [vmem:[%s522 + $0x10] sm:$0xff]
    %v526 = vld [vmem:[%s522 + $0x18] sm:$0xff]
    %v527 = vld [vmem:[%s522 + $0x20] sm:$0xff]
    %v528 = vld [vmem:[%s522 + $0x28] sm:$0xff]
    %v529 = vld [vmem:[%s522 + $0x30] sm:$0xff]
    %v530 = vld [vmem:[%s522 + $0x38] sm:$0xff]
    %s531 = scalar_lea.vmem %s2, 4
    %v532 = vld [vmem:[%s531] sm:$0x3]
    %v534 = vlaneseq
    %v535 = vshrl.u32 %v534, 7
    %v536 = vsub.s32 0, %v535
    %v537 = vrot.slane %v532, %v536
    %v538 = vlaneseq
    %v539 = vshrl.u32 %v538, 7
    %v540 = vsub.s32 1, %v539
    %v541 = vrot.slane %v532, %v540
    %v552 = vrot.slane %v515, 7
    %v553 = vsel %vm86, %v552, %v514
    %v554 = vrot.slane %v516, 6
    %v555 = vsel %vm89, %v554, %v553
    %v556 = vrot.slane %v517, 5
    %v557 = vsel %vm92, %v556, %v555
    %v558 = vrot.slane %v518, 4
    %v559 = vsel %vm95, %v558, %v557
    %v560 = vrot.slane %v519, 3
    %v561 = vsel %vm98, %v560, %v559
    %v562 = vrot.slane %v520, 2
    %v563 = vsel %vm101, %v562, %v561
    %v564 = vrot.slane %v521, 1
    %v565 = vsel %vm104, %v564, %v563
    %v566 = vsel %vm106, %v565, 0
    %568 = vmatprep.subr.mxu0 %v524
    %569 = vmatpush1.msra.mxu0 %v523
    %570 = vmatprep.subr.mxu0 %v526
    %571 = vmatpush1.msra.mxu0 %v525
    %572 = vmatprep.subr.mxu0 %v528
    %573 = vmatpush1.msra.mxu0 %v527
    %574 = vmatprep.subr.mxu0 %v530
    %575 = vmatpush1.msra.mxu0 %v529
    %576 = vmatprep.subr.mxu0 0.0
    %577 = vmatpush1.msra.mxu0 0.0
    %578 = vmatprep.subr.mxu0 0.0
    %579 = vmatpush1.msra.mxu0 0.0
    %580 = vmatprep.subr.mxu0 0.0
    %581 = vmatpush1.msra.mxu0 0.0
    %582 = vmatprep.subr.mxu0 0.0
    %583 = vmatpush1.msra.mxu0 0.0
    %584 = vmatprep.subr.mxu0 0.0
    %585 = vmatpush1.msra.mxu0 0.0
    %586 = vmatprep.subr.mxu0 0.0
    %587 = vmatpush1.msra.mxu0 0.0
    %588 = vmatprep.subr.mxu0 0.0
    %589 = vmatpush1.msra.mxu0 0.0
    %590 = vmatprep.subr.mxu0 0.0
    %591 = vmatpush1.msra.mxu0 0.0
    %592 = vmatprep.subr.mxu0 0.0
    %593 = vmatpush1.msra.mxu0 0.0
    %594 = vmatprep.subr.mxu0 0.0
    %595 = vmatpush1.msra.mxu0 0.0
    %596 = vmatprep.subr.mxu0 0.0
    %597 = vmatpush1.msra.mxu0 0.0
    %598 = vmatprep.subr.mxu0 0.0
    %599 = vmatpush1.msra.mxu0 0.0
    %600 = vmatprep.subr.mxu0 0.0
    %601 = vmatpush1.msra.mxu0 0.0
    %602 = vmatprep.subr.mxu0 0.0
    %603 = vmatpush1.msra.mxu0 0.0
    %604 = vmatprep.subr.mxu0 0.0
    %605 = vmatpush1.msra.mxu0 0.0
    %606 = vmatprep.subr.mxu0 0.0
    %607 = vmatpush1.msra.mxu0 0.0
    %608 = vmatprep.subr.mxu0 0.0
    %609 = vmatpush1.msra.mxu0 0.0
    %610 = vmatprep.subr.mxu0 0.0
    %611 = vmatpush1.msra.mxu0 0.0
    %612 = vmatprep.subr.mxu0 0.0
    %613 = vmatpush1.msra.mxu0 0.0
    %614 = vmatprep.subr.mxu0 0.0
    %615 = vmatpush1.msra.mxu0 0.0
    %616 = vmatprep.subr.mxu0 0.0
    %617 = vmatpush1.msra.mxu0 0.0
    %618 = vmatprep.subr.mxu0 0.0
    %619 = vmatpush1.msra.mxu0 0.0
    %620 = vmatprep.subr.mxu0 0.0
    %621 = vmatpush1.msra.mxu0 0.0
    %622 = vmatprep.subr.mxu0 0.0
    %623 = vmatpush1.msra.mxu0 0.0
    %624 = vmatprep.subr.mxu0 0.0
    %625 = vmatpush1.msra.mxu0 0.0
    %626 = vmatprep.subr.mxu0 0.0
    %627 = vmatpush1.msra.mxu0 0.0
    %628 = vmatprep.subr.mxu0 0.0
    %629 = vmatpush1.msra.mxu0 0.0
    %630 = vmatprep.subr.mxu0 0.0
    %631 = vmatpush1.msra.mxu0 0.0
    %632 = vmatprep.mubr.f32.mxu0 0.0
    %633 = vmatmul.mubr.f32.gmra.mrb[0].mxu0 %v566
    %v634 = vpop.f32.mrb[0].mxu0
    %v635 = vadd.f32 %v537, %v634
    %v636 = vpop.f32.mrb[0].mxu0
    %v637 = vadd.f32 %v541, %v636
    %638 = vdwg.mxu0
    %v639 = vmax.f32 %v635, 0.0
    %v640 = vmax.f32 %v637, 0.0
    %s641 = scalar_lea.vmem [#allocation5], 320
    %v642 = vld [vmem:[%s641] sm:$0xff]
    %v643 = vld [vmem:[%s641 + $0x8] sm:$0xff]
    %v644 = vld [vmem:[%s641 + $0x10] sm:$0xff]
    %v645 = vld [vmem:[%s641 + $0x18] sm:$0xff]
    %v646 = vld [vmem:[%s641 + $0x20] sm:$0xff]
    %v647 = vld [vmem:[%s641 + $0x28] sm:$0xff]
    %v648 = vld [vmem:[%s641 + $0x30] sm:$0xff]
    %v649 = vld [vmem:[%s641 + $0x38] sm:$0xff]
    %v650 = vld [vmem:[%s641 + $0x40] sm:$0xff]
    %v651 = vld [vmem:[%s641 + $0x48] sm:$0xff]
    %v652 = vld [vmem:[%s641 + $0x50] sm:$0xff]
    %v653 = vld [vmem:[%s641 + $0x58] sm:$0xff]
    %v654 = vld [vmem:[%s641 + $0x60] sm:$0xff]
    %v655 = vld [vmem:[%s641 + $0x68] sm:$0xff]
    %v656 = vld [vmem:[%s641 + $0x70] sm:$0xff]
    %v657 = vld [vmem:[%s641 + $0x78] sm:$0xff]
    %v658 = vld [vmem:[%s641 + $0x80] sm:$0xff]
    %v659 = vld [vmem:[%s641 + $0x88] sm:$0xff]
    %v660 = vld [vmem:[%s641 + $0x90] sm:$0xff]
    %v661 = vld [vmem:[%s641 + $0x98] sm:$0xff]
    %s662 = scalar_lea.vmem %s4, 2
    %v663 = vld [vmem:[%s662] sm:$0x1]
    %v665 = vlaneseq
    %v666 = vshrl.u32 %v665, 7
    %v667 = vsub.s32 0, %v666
    %v668 = vrot.slane %v663, %v667
    %v671 = vsel %vm106, %v640, 0
    %673 = vmatprep.subr.mxu0 0.0
    %674 = vmatpush1.msra.mxu0 %v642
    %675 = vmatprep.subr.mxu0 0.0
    %676 = vmatpush1.msra.mxu0 %v643
    %677 = vmatprep.subr.mxu0 0.0
    %678 = vmatpush1.msra.mxu0 %v644
    %679 = vmatprep.subr.mxu0 0.0
    %680 = vmatpush1.msra.mxu0 %v645
    %681 = vmatprep.subr.mxu0 0.0
    %682 = vmatpush1.msra.mxu0 %v646
    %683 = vmatprep.subr.mxu0 0.0
    %684 = vmatpush1.msra.mxu0 %v647
    %685 = vmatprep.subr.mxu0 0.0
    %686 = vmatpush1.msra.mxu0 %v648
    %687 = vmatprep.subr.mxu0 0.0
    %688 = vmatpush1.msra.mxu0 %v649
    %689 = vmatprep.subr.mxu0 0.0
    %690 = vmatpush1.msra.mxu0 %v650
    %691 = vmatprep.subr.mxu0 0.0
    %692 = vmatpush1.msra.mxu0 %v651
    %693 = vmatprep.subr.mxu0 0.0
    %694 = vmatpush1.msra.mxu0 %v652
    %695 = vmatprep.subr.mxu0 0.0
    %696 = vmatpush1.msra.mxu0 %v653
    %697 = vmatprep.subr.mxu0 0.0
    %698 = vmatpush1.msra.mxu0 %v654
    %699 = vmatprep.subr.mxu0 0.0
    %700 = vmatpush1.msra.mxu0 %v655
    %701 = vmatprep.subr.mxu0 0.0
    %702 = vmatpush1.msra.mxu0 %v656
    %703 = vmatprep.subr.mxu0 0.0
    %704 = vmatpush1.msra.mxu0 %v657
    %705 = vmatprep.subr.mxu0 0.0
    %706 = vmatpush1.msra.mxu0 %v658
    %707 = vmatprep.subr.mxu0 0.0
    %708 = vmatpush1.msra.mxu0 %v659
    %709 = vmatprep.subr.mxu0 0.0
    %710 = vmatpush1.msra.mxu0 %v660
    %711 = vmatprep.subr.mxu0 0.0
    %712 = vmatpush1.msra.mxu0 %v661
    %713 = vmatprep.subr.mxu0 0.0
    %714 = vmatpush1.msra.mxu0 0.0
    %715 = vmatprep.subr.mxu0 0.0
    %716 = vmatpush1.msra.mxu0 0.0
    %717 = vmatprep.subr.mxu0 0.0
    %718 = vmatpush1.msra.mxu0 0.0
    %719 = vmatprep.subr.mxu0 0.0
    %720 = vmatpush1.msra.mxu0 0.0
    %721 = vmatprep.subr.mxu0 0.0
    %722 = vmatpush1.msra.mxu0 0.0
    %723 = vmatprep.subr.mxu0 0.0
    %724 = vmatpush1.msra.mxu0 0.0
    %725 = vmatprep.subr.mxu0 0.0
    %726 = vmatpush1.msra.mxu0 0.0
    %727 = vmatprep.subr.mxu0 0.0
    %728 = vmatpush1.msra.mxu0 0.0
    %729 = vmatprep.subr.mxu0 0.0
    %730 = vmatpush1.msra.mxu0 0.0
    %731 = vmatprep.subr.mxu0 0.0
    %732 = vmatpush1.msra.mxu0 0.0
    %733 = vmatprep.subr.mxu0 0.0
    %734 = vmatpush1.msra.mxu0 0.0
    %735 = vmatprep.subr.mxu0 0.0
    %736 = vmatpush1.msra.mxu0 0.0
    %737 = vmatprep.mubr.f32.mxu0 %v671
    %738 = vmatmul.mubr.f32.gmra.mrb[0].mxu0 %v639
    %v739 = vpop.f32.mrb[0].mxu0
    %v740 = vadd.f32 %v668, %v739
    %v741 = vpop.f32.mrb[0].mxu0
    %742 = vdwg.mxu0
    %s743 = scalar_lea.vmem [#allocation7], 16
    %744 = vst [vmem:[%s743] sm:$0xff] %v740
    // Predicated region
    $region30: #{tpu_custom_call.1} parent=1 // pred_check
      _
    $region31: #{tpu_custom_call.1} parent=1 // pred_check_branch
      %746 = sbr.rel (0) target = $region33
    $region32: #{tpu_custom_call.1} parent=1 // pred_region
      %s748 = ssub.s32 384, 384
      %749 = vsyncadd [#allocation4], %s748
      %s750 = sshll.u32 [#allocation7], 4
      %s751 = int_to_ptr.vmem [resolvable:$true] %s750
      %756 = dma.vmem_to_hbm [thread:$0]  %s751, 384, %s5, [#allocation4], 128, 128, 8
    $region33: #{tpu_custom_call.1} parent=1 // pred_fallthru
      _
    // Predicated region
    $region34: #{tpu_custom_call.1} parent=1 // pred_check
      _
    $region35: #{tpu_custom_call.1} parent=1 // pred_check_branch
      %758 = sbr.rel (0) target = $region37
    $region36: #{tpu_custom_call.1} parent=1 // pred_region
      %759 = dma.done [#allocation4], 384
    $region37: #{tpu_custom_call.1} parent=1 // pred_fallthru
      _
    %760 = vsyncpa [#allocation3], 1
    %761 = vsyncpa [#allocation6], 1
    %762 = vsyncpa [#allocation4], 1

</llo_original>
